<compile_context>
chip_gen: v6e
topology: v6e:2x2x1
jax: 0.10.0
libtpu: 0.0.40
codegen_flags: <defaults>
</compile_context>

<pallas_src>
import functools

import jax
import jax.numpy as jnp
from jax import lax
from jax.experimental import pallas as pl
from jax.experimental.pallas import tpu as pltpu


def _mlp_kernel(x_ref, w1_ref, b1_ref, w2_ref, b2_ref, w3t_ref, b3_ref, y_ref,
                *, chunk):
    nn_out, block_b = y_ref.shape
    n_chunks = block_b // chunk

    # Weights / biases are tiny; keep them resident across the lane sub-chunks.
    w1 = w1_ref[...]            # (64, nn_in)   bf16
    w2 = w2_ref[...]            # (32, 64)      bf16
    b1 = b1_ref[...]            # (64, 1)       f32
    b2 = b2_ref[...]            # (32, 1)       f32
    w3t = w3t_ref[...]          # (32, nn_out)  f32  (layer 3 runs on the VPU)

    def body(c, carry):
        start = pl.multiple_of(c * chunk, 128)

        # x sub-chunk in natural (batch, feature) layout; dot_general contracts
        # axis 1 of both operands, so no wrapper-side / materialized transpose.
        xc = x_ref[pl.ds(start, chunk), :].astype(jnp.bfloat16)       # (chunk, nn_in)

        # Layer 1: Linear(nn_in, 64) + LeakyReLU(0.01); batch lives on lanes.
        h1 = lax.dot_general(w1, xc, (((1,), (1,)), ((), ())),
                             preferred_element_type=jnp.float32) + b1  # (64, chunk)
        h1 = jnp.maximum(h1, 0.01 * h1)

        # Layer 2: Linear(64, 32) + sigmoid (exp + reciprocal both on the EUP).
        h2 = jnp.dot(w2, h1.astype(jnp.bfloat16),
                     preferred_element_type=jnp.float32) + b2          # (32, chunk)
        # Clamp so exp never overflows -> the approximate reciprocal stays safe.
        h2 = pl.reciprocal(1.0 + jnp.exp(-jnp.maximum(h2, -30.0)), approx=True)

        # Layer 3: Linear(32, nn_out) with nn_out tiny: weighted sublane
        # reduction on the VPU/XLU instead of the MXU (MXU push is the binding
        # slot and this matmul would be ~1/3 of it).  W3/b3 stay in f32.
        for m in range(nn_out):
            wm = w3t[:, m:m + 1]                                        # (32, 1)
            ym = jnp.sum(h2 * wm, axis=0, keepdims=True) + b3_ref[m]    # (1, chunk)
            y_ref[m:m + 1, pl.ds(start, chunk)] = ym.astype(y_ref.dtype)
        return carry

    lax.fori_loop(0, n_chunks, body, None, unroll=True)


def _round_up(n, m):
    return ((n + m - 1) // m) * m


def fc_wave_xy_forward(x, params, *, block_b=2048, chunk=256):
    """Pallas forward for FC_wave_xy. Returns (x, y), like the PyTorch module.

    params are in PyTorch layout: w_i is (out, in), b_i is (out,).
    """
    w1, b1, w2, b2, w3, b3 = params
    B, nn_in = x.shape
    nn_out = w3.shape[0]

    # Batch sits on the lane axis of the kernel's intermediates/outputs, so the
    # tile must be a multiple of 128.  Cap it so that (a) it does not exceed
    # the (rounded-up) batch and (b) there are >= 2 grid steps whenever the
    # batch allows it, so the "parallel" axis can shard across both v7x cores.
    b_ceil = _round_up(B, 128)
    block_b = max(128, min(block_b, b_ceil))
    if b_ceil >= 256:
        block_b = min(block_b, _round_up((b_ceil + 1) // 2, 128))
    B_pad = _round_up(B, block_b)

    # Lane sub-chunk: largest 128-multiple divisor of block_b not above `chunk`
    # (keeps each chunk's f32 h1/h2 inside the 64-vreg file -> no spills).
    nb = block_b // 128
    d = max(k for k in range(1, nb + 1) if nb % k == 0 and 128 * k <= max(chunk, 128))
    chunk_b = 128 * d

    # Only pad when the batch is not already tile-aligned (a simple, cheap copy
    # — no transposes of x anywhere in the wrapper).
    x_f = x.astype(jnp.float32)
    if B_pad != B:
        x_f = jnp.pad(x_f, ((0, B_pad - B), (0, 0)))

    # MXU layers in bf16 (f32 accumulation in-kernel); layer 3 / biases in f32.
    w1_b = jnp.asarray(w1, jnp.bfloat16)            # (64, nn_in)
    w2_b = jnp.asarray(w2, jnp.bfloat16)            # (32, 64)
    w3_t = jnp.asarray(w3, jnp.float32).T           # (32, nn_out)
    b1_c = jnp.asarray(b1, jnp.float32).reshape(-1, 1)
    b2_c = jnp.asarray(b2, jnp.float32).reshape(-1, 1)
    b3_s = jnp.asarray(b3, jnp.float32)             # -> SMEM scalars

    grid = (B_pad // block_b,)
    full = lambda a: pl.BlockSpec(a.shape, lambda i: (0, 0))

    flops = 2 * B_pad * (nn_in * 64 + 64 * 32 + 32 * nn_out)
    bytes_accessed = (4 * B_pad * (nn_in + nn_out)
                      + 2 * (w1_b.size + w2_b.size) + 4 * w3_t.size
                      + 4 * (b1_c.size + b2_c.size + b3_s.size))

    kernel = functools.partial(_mlp_kernel, chunk=chunk_b)

    y_t = pl.pallas_call(
        kernel,
        out_shape=jax.ShapeDtypeStruct((nn_out, B_pad), jnp.float32),
        grid_spec=pltpu.PrefetchScalarGridSpec(
            num_scalar_prefetch=0,
            grid=grid,
            in_specs=[
                pl.BlockSpec((block_b, nn_in), lambda i: (i, 0)),   # x, natural layout
                full(w1_b), full(b1_c),
                full(w2_b), full(b2_c),
                full(w3_t),
                pl.BlockSpec(memory_space=pltpu.MemorySpace.SMEM),  # b3 scalars
            ],
            out_specs=pl.BlockSpec((nn_out, block_b), lambda i: (0, i)),
        ),
        compiler_params=pltpu.CompilerParams(
            dimension_semantics=("parallel",),
        ),
        cost_estimate=pl.CostEstimate(
            flops=flops,
            transcendentals=32 * B_pad,
            bytes_accessed=bytes_accessed,
        ),
    )(x_f, w1_b, b1_c, w2_b, b2_c, w3_t, b3_s)

    # Kernel output stays lane-dense (nn_out, B_pad); the tiny transpose back
    # to PyTorch's (B, nn_out) happens once here (or can be fused downstream).
    y = y_t[:, :B].T
    return x, y


def init_params(nn_in, nn_out, key):
    """Deterministic PyTorch-style (out, in) weights / (out,) biases."""
    dims = [(64, nn_in), (32, 64), (nn_out, 32)]
    keys = jax.random.split(key, 2 * len(dims))
    params = []
    for idx, (fan_out, fan_in) in enumerate(dims):
        bound = 1.0 / jnp.sqrt(fan_in)
        w = jax.random.uniform(keys[2 * idx], (fan_out, fan_in),
                               minval=-bound, maxval=bound, dtype=jnp.float32)
        b = jax.random.uniform(keys[2 * idx + 1], (fan_out,),
                               minval=-bound, maxval=bound, dtype=jnp.float32)
        params.extend([w, b])
    return tuple(params)


def _reference_forward(x, params):
    w1, b1, w2, b2, w3, b3 = params
    h1 = x @ w1.T + b1
    h1 = jnp.where(h1 > 0, h1, 0.01 * h1)
    h2 = jax.nn.sigmoid(h1 @ w2.T + b2)
    return x, h2 @ w3.T + b3


if __name__ == "__main__":
    nn_in, nn_out, batch = 8, 4, 16
    key = jax.random.PRNGKey(0)
    k_x, k_p = jax.random.split(key)

    x = jax.random.normal(k_x, (batch, nn_in), dtype=jnp.float32)
    params = init_params(nn_in, nn_out, k_p)

    fwd = jax.jit(functools.partial(fc_wave_xy_forward, block_b=2048, chunk=256))
    x_out, y = jax.block_until_ready(fwd(x, params))

    # Sanity-check against a pure-JAX f32 reference of the same math.
    # (Layers 1/2 run on the MXU in bf16 with f32 accumulation -> looser tol.)
    _, y_ref = _reference_forward(x, params)
    assert x_out.shape == (batch, nn_in) and y.shape == (batch, nn_out)
    assert y.dtype == jnp.float32
    assert jnp.allclose(y, y_ref, atol=2e-2, rtol=2e-2)
    assert jnp.array_equal(x_out, x)

    print("KERNEL_OK")
</pallas_src>

<mosaic_0001>
module attributes {stable_mosaic.version = 11 : i64} {
  func.func @_mlp_kernel(%arg0: i32, %arg1: memref<128x8xf32, #tpu.memory_space<vmem>>, %arg2: memref<64x8xbf16, #tpu.memory_space<vmem>>, %arg3: memref<64x1xf32, #tpu.memory_space<vmem>>, %arg4: memref<32x64xbf16, #tpu.memory_space<vmem>>, %arg5: memref<32x1xf32, #tpu.memory_space<vmem>>, %arg6: memref<32x4xf32, #tpu.memory_space<vmem>>, %arg7: memref<4xf32, #tpu.memory_space<smem>>, %arg8: memref<4x128xf32, #tpu.memory_space<vmem>>) attributes {dimension_semantics = [#tpu.dimension_semantics<parallel>], iteration_bounds = array<i64: 1>, scalar_prefetch = 0 : i64, scratch_operands = 0 : i64, tpu.core_type = #tpu.core_type<tc>, window_params = [{transform_indices = @transform_0, window_bounds = array<i64: 128, 8>}, {pipeline_mode = #tpu.pipeline_mode<synchronous>, transform_indices = @transform_1, window_bounds = array<i64: 64, 8>}, {pipeline_mode = #tpu.pipeline_mode<synchronous>, transform_indices = @transform_2, window_bounds = array<i64: 64, 1>}, {pipeline_mode = #tpu.pipeline_mode<synchronous>, transform_indices = @transform_3, window_bounds = array<i64: 32, 64>}, {pipeline_mode = #tpu.pipeline_mode<synchronous>, transform_indices = @transform_4, window_bounds = array<i64: 32, 1>}, {pipeline_mode = #tpu.pipeline_mode<synchronous>, transform_indices = @transform_5, window_bounds = array<i64: 32, 4>}, {transform_indices = @transform_6, window_bounds = array<i64: 4>}, {transform_indices = @transform_7, window_bounds = array<i64: 4, 128>}]} {
    %c0 = arith.constant 0 : index
    %c0_0 = arith.constant 0 : index
    %0 = vector.load %arg2[%c0, %c0_0] : memref<64x8xbf16, #tpu.memory_space<vmem>>, vector<64x8xbf16>
    %c0_1 = arith.constant 0 : index
    %c0_2 = arith.constant 0 : index
    %1 = vector.load %arg4[%c0_1, %c0_2] : memref<32x64xbf16, #tpu.memory_space<vmem>>, vector<32x64xbf16>
    %c0_3 = arith.constant 0 : index
    %c0_4 = arith.constant 0 : index
    %2 = vector.load %arg3[%c0_3, %c0_4] : memref<64x1xf32, #tpu.memory_space<vmem>>, vector<64x1xf32>
    %c0_5 = arith.constant 0 : index
    %c0_6 = arith.constant 0 : index
    %3 = vector.load %arg5[%c0_5, %c0_6] : memref<32x1xf32, #tpu.memory_space<vmem>>, vector<32x1xf32>
    %c0_7 = arith.constant 0 : index
    %c0_8 = arith.constant 0 : index
    %4 = vector.load %arg6[%c0_7, %c0_8] : memref<32x4xf32, #tpu.memory_space<vmem>>, vector<32x4xf32>
    %c0_i32 = arith.constant 0 : i32
    %c128_i32 = arith.constant 128 : i32
    %5 = arith.muli %c0_i32, %c128_i32 : i32
    %6 = tpu.assume_multiple %5, 128 : i32
    %7 = arith.index_cast %6 : i32 to index
    %c0_9 = arith.constant 0 : index
    %8 = vector.load %arg1[%7, %c0_9] : memref<128x8xf32, #tpu.memory_space<vmem>>, vector<128x8xf32>
    %9 = arith.truncf %8 : vector<128x8xf32> to vector<128x8xbf16>
    %cst = arith.constant dense<0.000000e+00> : vector<64x128xf32>
    %10 = tpu.matmul %0, %9, %cst {dimension_numbers = #tpu.dot_dimension_numbers<[1], [1], [0], [0], [0, 0, 1, 0], [], []>} : vector<64x8xbf16>, vector<128x8xbf16>, vector<64x128xf32> -> vector<64x128xf32>
    %11 = vector.broadcast %2 : vector<64x1xf32> to vector<64x128xf32>
    %12 = arith.addf %10, %11 : vector<64x128xf32>
    %cst_10 = arith.constant 0.00999999977 : f32
    %13 = vector.broadcast %cst_10 : f32 to vector<64x128xf32>
    %14 = arith.mulf %13, %12 : vector<64x128xf32>
    %15 = arith.maximumf %12, %14 : vector<64x128xf32>
    %16 = arith.truncf %15 : vector<64x128xf32> to vector<64x128xbf16>
    %cst_11 = arith.constant dense<0.000000e+00> : vector<32x128xf32>
    %17 = tpu.matmul %1, %16, %cst_11 {dimension_numbers = #tpu.dot_dimension_numbers<[1], [0], [0], [1], [0, 0, 1, 1], [], []>} : vector<32x64xbf16>, vector<64x128xbf16>, vector<32x128xf32> -> vector<32x128xf32>
    %18 = vector.broadcast %3 : vector<32x1xf32> to vector<32x128xf32>
    %19 = arith.addf %17, %18 : vector<32x128xf32>
    %cst_12 = arith.constant -3.000000e+01 : f32
    %20 = vector.broadcast %cst_12 : f32 to vector<32x128xf32>
    %21 = arith.maximumf %19, %20 : vector<32x128xf32>
    %cst_13 = arith.constant 0.000000e+00 : f32
    %22 = vector.broadcast %cst_13 : f32 to vector<32x128xf32>
    %23 = arith.subf %22, %21 : vector<32x128xf32>
    %24 = math.exp %23 : vector<32x128xf32>
    %cst_14 = arith.constant 1.000000e+00 : f32
    %25 = vector.broadcast %cst_14 : f32 to vector<32x128xf32>
    %26 = arith.addf %25, %24 : vector<32x128xf32>
    %27 = tpu.reciprocal %26 {approx = true} : vector<32x128xf32> -> vector<32x128xf32>
    %28 = vector.extract_strided_slice %4 {offsets = [0, 0], sizes = [32, 1], strides = [1, 1]} : vector<32x4xf32> to vector<32x1xf32>
    %29 = vector.broadcast %28 : vector<32x1xf32> to vector<32x128xf32>
    %30 = arith.mulf %27, %29 : vector<32x128xf32>
    %cst_15 = arith.constant dense<0.000000e+00> : vector<128xf32>
    %31 = vector.multi_reduction <add>, %30, %cst_15 [0] : vector<32x128xf32> to vector<128xf32>
    %32 = vector.shape_cast %31 : vector<128xf32> to vector<1x128xf32>
    %c0_16 = arith.constant 0 : index
    %33 = memref.load %arg7[%c0_16] : memref<4xf32, #tpu.memory_space<smem>>
    %34 = vector.broadcast %33 : f32 to vector<1x128xf32>
    %35 = arith.addf %32, %34 : vector<1x128xf32>
    %c0_17 = arith.constant 0 : index
    %36 = arith.index_cast %6 : i32 to index
    %37 = vector.load %arg8[%c0_17, %36] : memref<4x128xf32, #tpu.memory_space<vmem>>, vector<1x128xf32>
    tpu.vector_store %arg8[%c0_17, %36], %35 {strides = array<i32>} : memref<4x128xf32, #tpu.memory_space<vmem>>, vector<1x128xf32>,
    %38 = vector.extract_strided_slice %4 {offsets = [0, 1], sizes = [32, 1], strides = [1, 1]} : vector<32x4xf32> to vector<32x1xf32>
    %39 = vector.broadcast %38 : vector<32x1xf32> to vector<32x128xf32>
    %40 = arith.mulf %27, %39 : vector<32x128xf32>
    %cst_18 = arith.constant dense<0.000000e+00> : vector<128xf32>
    %41 = vector.multi_reduction <add>, %40, %cst_18 [0] : vector<32x128xf32> to vector<128xf32>
    %42 = vector.shape_cast %41 : vector<128xf32> to vector<1x128xf32>
    %c1 = arith.constant 1 : index
    %43 = memref.load %arg7[%c1] : memref<4xf32, #tpu.memory_space<smem>>
    %44 = vector.broadcast %43 : f32 to vector<1x128xf32>
    %45 = arith.addf %42, %44 : vector<1x128xf32>
    %c1_19 = arith.constant 1 : index
    %46 = arith.index_cast %6 : i32 to index
    %47 = vector.load %arg8[%c1_19, %46] : memref<4x128xf32, #tpu.memory_space<vmem>>, vector<1x128xf32>
    tpu.vector_store %arg8[%c1_19, %46], %45 {strides = array<i32>} : memref<4x128xf32, #tpu.memory_space<vmem>>, vector<1x128xf32>,
    %48 = vector.extract_strided_slice %4 {offsets = [0, 2], sizes = [32, 1], strides = [1, 1]} : vector<32x4xf32> to vector<32x1xf32>
    %49 = vector.broadcast %48 : vector<32x1xf32> to vector<32x128xf32>
    %50 = arith.mulf %27, %49 : vector<32x128xf32>
    %cst_20 = arith.constant dense<0.000000e+00> : vector<128xf32>
    %51 = vector.multi_reduction <add>, %50, %cst_20 [0] : vector<32x128xf32> to vector<128xf32>
    %52 = vector.shape_cast %51 : vector<128xf32> to vector<1x128xf32>
    %c2 = arith.constant 2 : index
    %53 = memref.load %arg7[%c2] : memref<4xf32, #tpu.memory_space<smem>>
    %54 = vector.broadcast %53 : f32 to vector<1x128xf32>
    %55 = arith.addf %52, %54 : vector<1x128xf32>
    %c2_21 = arith.constant 2 : index
    %56 = arith.index_cast %6 : i32 to index
    %57 = vector.load %arg8[%c2_21, %56] : memref<4x128xf32, #tpu.memory_space<vmem>>, vector<1x128xf32>
    tpu.vector_store %arg8[%c2_21, %56], %55 {strides = array<i32>} : memref<4x128xf32, #tpu.memory_space<vmem>>, vector<1x128xf32>,
    %58 = vector.extract_strided_slice %4 {offsets = [0, 3], sizes = [32, 1], strides = [1, 1]} : vector<32x4xf32> to vector<32x1xf32>
    %59 = vector.broadcast %58 : vector<32x1xf32> to vector<32x128xf32>
    %60 = arith.mulf %27, %59 : vector<32x128xf32>
    %cst_22 = arith.constant dense<0.000000e+00> : vector<128xf32>
    %61 = vector.multi_reduction <add>, %60, %cst_22 [0] : vector<32x128xf32> to vector<128xf32>
    %62 = vector.shape_cast %61 : vector<128xf32> to vector<1x128xf32>
    %c3 = arith.constant 3 : index
    %63 = memref.load %arg7[%c3] : memref<4xf32, #tpu.memory_space<smem>>
    %64 = vector.broadcast %63 : f32 to vector<1x128xf32>
    %65 = arith.addf %62, %64 : vector<1x128xf32>
    %c3_23 = arith.constant 3 : index
    %66 = arith.index_cast %6 : i32 to index
    %67 = vector.load %arg8[%c3_23, %66] : memref<4x128xf32, #tpu.memory_space<vmem>>, vector<1x128xf32>
    tpu.vector_store %arg8[%c3_23, %66], %65 {strides = array<i32>} : memref<4x128xf32, #tpu.memory_space<vmem>>, vector<1x128xf32>,
    %c1_i32 = arith.constant 1 : i32
    return
  }
  func.func @transform_0(%arg0: i32) -> (i32, i32) {
    %c0_i32 = arith.constant 0 : i32
    %c0_i32_0 = arith.constant 0 : i32
    return %arg0, %c0_i32 : i32, i32
  }
  func.func @transform_1(%arg0: i32) -> (i32, i32) {
    %c0_i32 = arith.constant 0 : i32
    %c0_i32_0 = arith.constant 0 : i32
    %c0_i32_1 = arith.constant 0 : i32
    return %c0_i32, %c0_i32_0 : i32, i32
  }
  func.func @transform_2(%arg0: i32) -> (i32, i32) {
    %c0_i32 = arith.constant 0 : i32
    %c0_i32_0 = arith.constant 0 : i32
    %c0_i32_1 = arith.constant 0 : i32
    return %c0_i32, %c0_i32_0 : i32, i32
  }
  func.func @transform_3(%arg0: i32) -> (i32, i32) {
    %c0_i32 = arith.constant 0 : i32
    %c0_i32_0 = arith.constant 0 : i32
    %c0_i32_1 = arith.constant 0 : i32
    return %c0_i32, %c0_i32_0 : i32, i32
  }
  func.func @transform_4(%arg0: i32) -> (i32, i32) {
    %c0_i32 = arith.constant 0 : i32
    %c0_i32_0 = arith.constant 0 : i32
    %c0_i32_1 = arith.constant 0 : i32
    return %c0_i32, %c0_i32_0 : i32, i32
  }
  func.func @transform_5(%arg0: i32) -> (i32, i32) {
    %c0_i32 = arith.constant 0 : i32
    %c0_i32_0 = arith.constant 0 : i32
    %c0_i32_1 = arith.constant 0 : i32
    return %c0_i32, %c0_i32_0 : i32, i32
  }
  func.func @transform_6(%arg0: i32) -> i32 {
    %c0_i32 = arith.constant 0 : i32
    %c0_i32_0 = arith.constant 0 : i32
    return %c0_i32 : i32
  }
  func.func @transform_7(%arg0: i32) -> (i32, i32) {
    %c0_i32 = arith.constant 0 : i32
    %c0_i32_0 = arith.constant 0 : i32
    return %c0_i32, %arg0 : i32, i32
  }
}

</mosaic_0001>

<llo_original>
// kernel: fc_wave_xy_forward.1
$region0: #{fc_wave_xy_forward.1}
  #allocation0 [shape = 'u32[]', space=smem, size = 0x4, offset = 0x4, fixed_abs, tag = 'smem constant byte address 0x4 - core index']
  #allocation1 [shape = 'u32[144,128]{1,0:T(1,128)}', space=vmem, size = 0x12000, scoped, tag = 'internal scratch']
  %s0 = inlined_call_operand.vmem [shape: f32[128,8], index: 0, kind: input, shape index: {}]
  %s1 = inlined_call_operand.vmem [shape: bf16[64,8], index: 1, kind: input, shape index: {}]
  %s2 = inlined_call_operand.vmem [shape: f32[64,1], index: 2, kind: input, shape index: {}]
  %s3 = inlined_call_operand.vmem [shape: bf16[32,64], index: 3, kind: input, shape index: {}]
  %s4 = inlined_call_operand.vmem [shape: f32[32,1], index: 4, kind: input, shape index: {}]
  %s5 = inlined_call_operand.vmem [shape: f32[32,4], index: 5, kind: input, shape index: {}]
  %s6 = inlined_call_operand.vmem [shape: f32[4], index: 6, kind: input, shape index: {}]
  %s7 = inlined_call_operand.vmem [shape: f32[4,128], index: 7, kind: output, shape index: {}]
  %s8 = sld [smem:[#allocation0]]
  $region42: #{fc_wave_xy_forward.1} parent=0
    _
  %s10 = ssub.s32 1, %s8
  %s11 = scalar_select 0, %s10, %s8
  $region1: #{fc_wave_xy_forward.1} parent=0
    #allocation2 [shape = 'u8[512]{0}', space=smem, size = 0x200, scoped, tag = 'input window, operand 6, single buffered']
    #allocation3 [shape = 's32[1]{0}', space=sflag, size = 0x4, scoped, tag = 'scoped memory for fc_wave_xy_forward.1']
    %12 = vsyncpa [#allocation3], 0
    // Predicated region
    $region2: #{fc_wave_xy_forward.1} parent=1 // pred_check
      _
    $region3: #{fc_wave_xy_forward.1} parent=1 // pred_check_branch
      %14 = sbr.rel (0) target = $region5
    $region4: #{fc_wave_xy_forward.1} parent=1 // pred_region
      _
    $region5: #{fc_wave_xy_forward.1} parent=1 // pred_fallthru
      _
    // Predicated region
    $region6: #{fc_wave_xy_forward.1} parent=1 // pred_check
      _
    $region7: #{fc_wave_xy_forward.1} parent=1 // pred_check_branch
      %16 = sbr.rel (0) target = $region9
    $region8: #{fc_wave_xy_forward.1} parent=1 // pred_region
      _
    $region9: #{fc_wave_xy_forward.1} parent=1 // pred_fallthru
      _
    // Predicated region
    $region10: #{fc_wave_xy_forward.1} parent=1 // pred_check
      _
    $region11: #{fc_wave_xy_forward.1} parent=1 // pred_check_branch
      %18 = sbr.rel (0) target = $region13
    $region12: #{fc_wave_xy_forward.1} parent=1 // pred_region
      _
    $region13: #{fc_wave_xy_forward.1} parent=1 // pred_fallthru
      _
    // Predicated region
    $region14: #{fc_wave_xy_forward.1} parent=1 // pred_check
      _
    $region15: #{fc_wave_xy_forward.1} parent=1 // pred_check_branch
      %20 = sbr.rel (0) target = $region17
    $region16: #{fc_wave_xy_forward.1} parent=1 // pred_region
      _
    $region17: #{fc_wave_xy_forward.1} parent=1 // pred_fallthru
      _
    // Predicated region
    $region18: #{fc_wave_xy_forward.1} parent=1 // pred_check
      _
    $region19: #{fc_wave_xy_forward.1} parent=1 // pred_check_branch
      %22 = sbr.rel (0) target = $region21
    $region20: #{fc_wave_xy_forward.1} parent=1 // pred_region
      _
    $region21: #{fc_wave_xy_forward.1} parent=1 // pred_fallthru
      _
    // Predicated region
    $region22: #{fc_wave_xy_forward.1} parent=1 // pred_check
      _
    $region23: #{fc_wave_xy_forward.1} parent=1 // pred_check_branch
      %24 = sbr.rel (0) target = $region25
    $region24: #{fc_wave_xy_forward.1} parent=1 // pred_region
      _
    $region25: #{fc_wave_xy_forward.1} parent=1 // pred_fallthru
      _
    // Predicated region
    $region26: #{fc_wave_xy_forward.1} parent=1 // pred_check
      _
    $region27: #{fc_wave_xy_forward.1} parent=1 // pred_check_branch
      %26 = sbr.rel (0) target = $region29
    $region28: #{fc_wave_xy_forward.1} parent=1 // pred_region
      %s28 = ssub.s32 16, 16
      %29 = vsyncadd [#allocation3], %s28
      %s31 = sshll.u32 %s6, 4
      %s32 = int_to_ptr.vmem [resolvable:$true] %s31
      %34 = dma.vmem_to_smem %s32, 16, [#allocation2], [#allocation3]
    $region29: #{fc_wave_xy_forward.1} parent=1 // pred_fallthru
      _
    // Predicated region
    $region30: #{fc_wave_xy_forward.1} parent=1 // pred_check
      _
    $region31: #{fc_wave_xy_forward.1} parent=1 // pred_check_branch
      %36 = sbr.rel (0) target = $region33
    $region32: #{fc_wave_xy_forward.1} parent=1 // pred_region
      %37 = dma.done [#allocation3], 16
    $region33: #{fc_wave_xy_forward.1} parent=1 // pred_fallthru
      _
    %38 = sfence
    %v40 = vld [vmem:[%s1] sm:$0xf]
    %v41 = vld [vmem:[%s1 + $0x4] sm:$0xf]
    %v42 = vld [vmem:[%s1 + $0x8] sm:$0xf]
    %v43 = vld [vmem:[%s1 + $0xc] sm:$0xf]
    %v44 = vld [vmem:[%s1 + $0x10] sm:$0xf]
    %v45 = vld [vmem:[%s1 + $0x14] sm:$0xf]
    %v46 = vld [vmem:[%s1 + $0x18] sm:$0xf]
    %v47 = vld [vmem:[%s1 + $0x1c] sm:$0xf]
    %v48 = vld [vmem:[%s3] sm:$0xf]
    %v49 = vld [vmem:[%s3 + $0x4] sm:$0xf]
    %v50 = vld [vmem:[%s3 + $0x8] sm:$0xf]
    %v51 = vld [vmem:[%s3 + $0xc] sm:$0xf]
    %v52 = vld [vmem:[%s2] sm:$0xff]
    %v53 = vld [vmem:[%s2 + $0x8] sm:$0xff]
    %v54 = vld [vmem:[%s2 + $0x10] sm:$0xff]
    %v55 = vld [vmem:[%s2 + $0x18] sm:$0xff]
    %v56 = vld [vmem:[%s2 + $0x20] sm:$0xff]
    %v57 = vld [vmem:[%s2 + $0x28] sm:$0xff]
    %v58 = vld [vmem:[%s2 + $0x30] sm:$0xff]
    %v59 = vld [vmem:[%s2 + $0x38] sm:$0xff]
    %v60 = vld [vmem:[%s4] sm:$0xff]
    %v61 = vld [vmem:[%s4 + $0x8] sm:$0xff]
    %v62 = vld [vmem:[%s4 + $0x10] sm:$0xff]
    %v63 = vld [vmem:[%s4 + $0x18] sm:$0xff]
    %v64 = vld [vmem:[%s5] sm:$0xff]
    %v65 = vld [vmem:[%s5 + $0x8] sm:$0xff]
    %v66 = vld [vmem:[%s5 + $0x10] sm:$0xff]
    %v67 = vld [vmem:[%s5 + $0x18] sm:$0xff]
    %v68 = vld [vmem:[%s0] sm:$0xff]
    %v69 = vld [vmem:[%s0 + $0x8] sm:$0xff]
    %v70 = vld [vmem:[%s0 + $0x10] sm:$0xff]
    %v71 = vld [vmem:[%s0 + $0x18] sm:$0xff]
    %v72 = vld [vmem:[%s0 + $0x20] sm:$0xff]
    %v73 = vld [vmem:[%s0 + $0x28] sm:$0xff]
    %v74 = vld [vmem:[%s0 + $0x30] sm:$0xff]
    %v75 = vld [vmem:[%s0 + $0x38] sm:$0xff]
    %v76 = vld [vmem:[%s0 + $0x40] sm:$0xff]
    %v77 = vld [vmem:[%s0 + $0x48] sm:$0xff]
    %v78 = vld [vmem:[%s0 + $0x50] sm:$0xff]
    %v79 = vld [vmem:[%s0 + $0x58] sm:$0xff]
    %v80 = vld [vmem:[%s0 + $0x60] sm:$0xff]
    %v81 = vld [vmem:[%s0 + $0x68] sm:$0xff]
    %v82 = vld [vmem:[%s0 + $0x70] sm:$0xff]
    %v83 = vld [vmem:[%s0 + $0x78] sm:$0xff]
    %v84 = vpack.c.bf16 %v69, %v68
    %v85 = vpack.c.bf16 %v71, %v70
    %v86 = vpack.c.bf16 %v73, %v72
    %v87 = vpack.c.bf16 %v75, %v74
    %v88 = vpack.c.bf16 %v77, %v76
    %v89 = vpack.c.bf16 %v79, %v78
    %v90 = vpack.c.bf16 %v81, %v80
    %v91 = vpack.c.bf16 %v83, %v82
    %93 = vset.pattern.permute.xlu0 0
    %94 = vperm.xlu0 %93, %v52
    %v95 = vpop.permute.xlu0 %94
    %98 = vset.pattern.permute.xlu0 0
    %99 = vperm.xlu0 %98, %v53
    %v100 = vpop.permute.xlu0 %99
    %103 = vset.pattern.permute.xlu0 0
    %104 = vperm.xlu0 %103, %v54
    %v105 = vpop.permute.xlu0 %104
    %108 = vset.pattern.permute.xlu0 0
    %109 = vperm.xlu0 %108, %v55
    %v110 = vpop.permute.xlu0 %109
    %113 = vset.pattern.permute.xlu0 0
    %114 = vperm.xlu0 %113, %v56
    %v115 = vpop.permute.xlu0 %114
    %118 = vset.pattern.permute.xlu0 0
    %119 = vperm.xlu0 %118, %v57
    %v120 = vpop.permute.xlu0 %119
    %123 = vset.pattern.permute.xlu0 0
    %124 = vperm.xlu0 %123, %v58
    %v125 = vpop.permute.xlu0 %124
    %128 = vset.pattern.permute.xlu0 0
    %129 = vperm.xlu0 %128, %v59
    %v130 = vpop.permute.xlu0 %129
    %v140 = vunpack.c.l.b16 %v40
    %v141 = vunpack.c.l.b16 %v41
    %v142 = vunpack.c.l.b16 %v42
    %v143 = vunpack.c.l.b16 %v43
    %v144 = vunpack.c.l.b16 %v44
    %v145 = vunpack.c.l.b16 %v45
    %v146 = vunpack.c.l.b16 %v46
    %v147 = vunpack.c.l.b16 %v47
    %v148 = vpack.c.b16 %v141, %v140
    %v149 = vpack.c.b16 %v143, %v142
    %v150 = vpack.c.b16 %v145, %v144
    %v151 = vpack.c.b16 %v147, %v146
    %vm152 = vcmask 64512
    %v154 = vsel %vm152, %v148, 0
    %v157 = vsel %vm152, %v149, 0
    %v160 = vsel %vm152, %v150, 0
    %v163 = vsel %vm152, %v151, 0
    %v166 = vsel %vm152, %v84, 0
    %v169 = vsel %vm152, %v85, 0
    %v172 = vsel %vm152, %v86, 0
    %v175 = vsel %vm152, %v87, 0
    %v178 = vsel %vm152, %v88, 0
    %v181 = vsel %vm152, %v89, 0
    %v184 = vsel %vm152, %v90, 0
    %v187 = vsel %vm152, %v91, 0
    %189 = vmatprep.subr.bf16.mxu0 0
    %190 = vmatpush1.bf16.xpose.msra.mxu0 %v187
    %191 = vmatprep.subr.bf16.mxu0 0
    %192 = vmatpush1.bf16.xpose.msra.mxu0 %v184
    %193 = vmatprep.subr.bf16.mxu0 0
    %194 = vmatpush1.bf16.xpose.msra.mxu0 %v181
    %195 = vmatprep.subr.bf16.mxu0 0
    %196 = vmatpush1.bf16.xpose.msra.mxu0 %v178
    %197 = vmatprep.subr.bf16.mxu0 0
    %198 = vmatpush1.bf16.xpose.msra.mxu0 %v175
    %199 = vmatprep.subr.bf16.mxu0 0
    %200 = vmatpush1.bf16.xpose.msra.mxu0 %v172
    %201 = vmatprep.subr.bf16.mxu0 0
    %202 = vmatpush1.bf16.xpose.msra.mxu0 %v169
    %203 = vmatprep.subr.bf16.mxu0 0
    %204 = vmatpush1.bf16.xpose.msra.mxu0 %v166
    %205 = vmatprep.subr.bf16.mxu0 0
    %206 = vmatpush2.bf16.xpose.msra.mxu0 0
    %207 = vmatprep.subr.bf16.mxu0 0
    %208 = vmatpush2.bf16.xpose.msra.mxu0 0
    %209 = vmatprep.subr.bf16.mxu0 0
    %210 = vmatpush2.bf16.xpose.msra.mxu0 0
    %211 = vmatprep.subr.bf16.mxu0 0
    %212 = vmatpush2.bf16.xpose.msra.mxu0 0
    %213 = vmatprep.subr.bf16.mxu0 0
    %214 = vmatpush2.bf16.xpose.msra.mxu0 0
    %215 = vmatprep.subr.bf16.mxu0 0
    %216 = vmatpush2.bf16.xpose.msra.mxu0 0
    %217 = vmatprep.subr.bf16.mxu0 0
    %218 = vmatpush2.bf16.xpose.msra.mxu0 0
    %219 = vmatprep.subr.bf16.mxu0 0
    %220 = vmatpush2.bf16.xpose.msra.mxu0 0
    %221 = vmatprep.mubr.bf16.mxu0 0
    %222 = vmatmul.mubr.bf16.gmra.mxu0 %v154
    %v223 = vpop.f32.mrf.mxu0
    %v224 = vadd.f32 %v95, %v223
    %v225 = vpop.f32.mrf.mxu0
    %v226 = vpop.f32.mrf.mxu0
    %v227 = vadd.f32 %v100, %v226
    %v228 = vpop.f32.mrf.mxu0
    %229 = vmatprep.mubr.bf16.mxu0 0
    %230 = vmatmul.mubr.bf16.gmra.mxu0 %v157
    %v231 = vpop.f32.mrf.mxu0
    %v232 = vadd.f32 %v105, %v231
    %v233 = vpop.f32.mrf.mxu0
    %v234 = vpop.f32.mrf.mxu0
    %v235 = vadd.f32 %v110, %v234
    %v236 = vpop.f32.mrf.mxu0
    %237 = vmatprep.mubr.bf16.mxu0 0
    %238 = vmatmul.mubr.bf16.gmra.mxu0 %v160
    %v239 = vpop.f32.mrf.mxu0
    %v240 = vadd.f32 %v115, %v239
    %v241 = vpop.f32.mrf.mxu0
    %v242 = vpop.f32.mrf.mxu0
    %v243 = vadd.f32 %v120, %v242
    %v244 = vpop.f32.mrf.mxu0
    %245 = vmatprep.mubr.bf16.mxu0 0
    %246 = vmatmul.mubr.bf16.gmra.mxu0 %v163
    %v247 = vpop.f32.mrf.mxu0
    %v248 = vadd.f32 %v125, %v247
    %v249 = vpop.f32.mrf.mxu0
    %v250 = vpop.f32.mrf.mxu0
    %v251 = vadd.f32 %v130, %v250
    %v252 = vpop.f32.mrf.mxu0
    %253 = vdwg.mxu0
    %v254 = vmul.f32 %v224, 0.01
    %v255 = vmul.f32 %v227, 0.01
    %v256 = vmul.f32 %v232, 0.01
    %v257 = vmul.f32 %v235, 0.01
    %v258 = vmul.f32 %v240, 0.01
    %v259 = vmul.f32 %v243, 0.01
    %v260 = vmul.f32 %v248, 0.01
    %v261 = vmul.f32 %v251, 0.01
    %v262 = vmax.f32 %v224, %v254
    %v263 = vmax.f32 %v227, %v255
    %v264 = vmax.f32 %v232, %v256
    %v265 = vmax.f32 %v235, %v257
    %v266 = vmax.f32 %v240, %v258
    %v267 = vmax.f32 %v243, %v259
    %v268 = vmax.f32 %v248, %v260
    %v269 = vmax.f32 %v251, %v261
    %v270 = vpack.c.bf16 %v263, %v262
    %v271 = vpack.c.bf16 %v265, %v264
    %v272 = vpack.c.bf16 %v267, %v266
    %v273 = vpack.c.bf16 %v269, %v268
    %275 = vset.pattern.permute.xlu0 0
    %276 = vperm.xlu0 %275, %v60
    %v277 = vpop.permute.xlu0 %276
    %280 = vset.pattern.permute.xlu0 0
    %281 = vperm.xlu0 %280, %v61
    %v282 = vpop.permute.xlu0 %281
    %285 = vset.pattern.permute.xlu0 0
    %286 = vperm.xlu0 %285, %v62
    %v287 = vpop.permute.xlu0 %286
    %290 = vset.pattern.permute.xlu0 0
    %291 = vperm.xlu0 %290, %v63
    %v292 = vpop.permute.xlu0 %291
    %v298 = vunpack.c.l.b16 %v48
    %v299 = vunpack.c.l.b16 %v49
    %v300 = vunpack.c.l.b16 %v50
    %v301 = vunpack.c.l.b16 %v51
    %v302 = vpack.c.b16 %v299, %v298
    %v303 = vpack.c.b16 %v301, %v300
    %vm304 = vcmask 523264
    %v306 = vsel %vm304, %v302, 0
    %v309 = vsel %vm304, %v303, 0
    %311 = vmatprep.subr.bf16.mxu0 0
    %312 = vmatpush1.bf16.msra.mxu0 0
    %313 = vmatprep.subr.bf16.mxu0 0
    %314 = vmatpush1.bf16.msra.mxu0 0
    %315 = vmatprep.subr.bf16.mxu0 0
    %316 = vmatpush1.bf16.msra.mxu0 0
    %317 = vmatprep.subr.bf16.mxu0 0
    %318 = vmatpush1.bf16.msra.mxu0 0
    %319 = vmatprep.subr.bf16.mxu0 0
    %320 = vmatpush1.bf16.msra.mxu0 %v273
    %321 = vmatprep.subr.bf16.mxu0 0
    %322 = vmatpush1.bf16.msra.mxu0 %v272
    %323 = vmatprep.subr.bf16.mxu0 0
    %324 = vmatpush1.bf16.msra.mxu0 %v271
    %325 = vmatprep.subr.bf16.mxu0 0
    %326 = vmatpush1.bf16.msra.mxu0 %v270
    %327 = vmatprep.subr.bf16.mxu0 0
    %328 = vmatpush2.bf16.msra.mxu0 0
    %329 = vmatprep.subr.bf16.mxu0 0
    %330 = vmatpush2.bf16.msra.mxu0 0
    %331 = vmatprep.subr.bf16.mxu0 0
    %332 = vmatpush2.bf16.msra.mxu0 0
    %333 = vmatprep.subr.bf16.mxu0 0
    %334 = vmatpush2.bf16.msra.mxu0 0
    %335 = vmatprep.subr.bf16.mxu0 0
    %336 = vmatpush2.bf16.msra.mxu0 0
    %337 = vmatprep.subr.bf16.mxu0 0
    %338 = vmatpush2.bf16.msra.mxu0 0
    %339 = vmatprep.subr.bf16.mxu0 0
    %340 = vmatpush2.bf16.msra.mxu0 0
    %341 = vmatprep.subr.bf16.mxu0 0
    %342 = vmatpush2.bf16.msra.mxu0 0
    %343 = vmatprep.mubr.bf16.mxu0 0
    %344 = vmatmul.mubr.bf16.gmra.mxu0 %v306
    %v345 = vpop.f32.mrf.mxu0
    %v346 = vadd.f32 %v277, %v345
    %v347 = vpop.f32.mrf.mxu0
    %v348 = vpop.f32.mrf.mxu0
    %v349 = vadd.f32 %v282, %v348
    %v350 = vpop.f32.mrf.mxu0
    %351 = vmatprep.mubr.bf16.mxu0 0
    %352 = vmatmul.mubr.bf16.gmra.mxu0 %v309
    %v353 = vpop.f32.mrf.mxu0
    %v354 = vadd.f32 %v287, %v353
    %v355 = vpop.f32.mrf.mxu0
    %v356 = vpop.f32.mrf.mxu0
    %v357 = vadd.f32 %v292, %v356
    %v358 = vpop.f32.mrf.mxu0
    %359 = vdwg.mxu0
    %v360 = vmax.f32 %v346, -30.0
    %v361 = vmax.f32 %v349, -30.0
    %v362 = vmax.f32 %v354, -30.0
    %v363 = vmax.f32 %v357, -30.0
    %v364 = vsub.f32 0.0, %v360
    %v365 = vsub.f32 0.0, %v361
    %v366 = vsub.f32 0.0, %v362
    %v367 = vsub.f32 0.0, %v363
    %v368 = vmul.f32 %v364, 1.442695
    %v369 = vpow.pop %v368
    %v370 = vmul.f32 %v365, 1.442695
    %v371 = vpow.pop %v370
    %v372 = vmul.f32 %v366, 1.442695
    %v373 = vpow.pop %v372
    %v374 = vmul.f32 %v367, 1.442695
    %v375 = vpow.pop %v374
    %v376 = vadd.f32 %v369, 1.0
    %v377 = vadd.f32 %v371, 1.0
    %v378 = vadd.f32 %v373, 1.0
    %v379 = vadd.f32 %v375, 1.0
    %v380 = vrcp.pop %v376
    %v381 = vrcp.pop %v377
    %v382 = vrcp.pop %v378
    %v383 = vrcp.pop %v379
    %385 = vset.pattern.permute.xlu0 0
    %386 = vperm.xlu0 %385, %v64
    %v387 = vpop.permute.xlu0 %386
    %390 = vset.pattern.permute.xlu0 0
    %391 = vperm.xlu0 %390, %v65
    %v392 = vpop.permute.xlu0 %391
    %395 = vset.pattern.permute.xlu0 0
    %396 = vperm.xlu0 %395, %v66
    %v397 = vpop.permute.xlu0 %396
    %400 = vset.pattern.permute.xlu0 0
    %401 = vperm.xlu0 %400, %v67
    %v402 = vpop.permute.xlu0 %401
    %v404 = vmul.f32 %v380, %v387
    %v405 = vmul.f32 %v381, %v392
    %v406 = vmul.f32 %v382, %v397
    %v407 = vmul.f32 %v383, %v402
    %v408 = vadd.f32 %v404, %v405
    %v409 = vadd.f32 %v408, %v406
    %v410 = vadd.f32 %v409, %v407
    %v411 = vrot.slane %v410, 4
    %v412 = vadd.f32 %v410, %v411
    %v413 = vrot.slane %v412, 2
    %v414 = vadd.f32 %v412, %v413
    %v415 = vrot.slane %v414, 1
    %v416 = vadd.f32 %v414, %v415
    %s417 = sld [smem:[#allocation2]]
    %v418 = vstv %s417
    %v419 = vadd.f32 %v416, %v418
    %420 = vst [vmem:[%s7] sm:$0x1] %v419
    %421 = vset.pattern.permute.xlu0 1
    %422 = vperm.xlu0 %421, %v64
    %v423 = vpop.permute.xlu0 %422
    %425 = vset.pattern.permute.xlu0 1
    %426 = vperm.xlu0 %425, %v65
    %v427 = vpop.permute.xlu0 %426
    %429 = vset.pattern.permute.xlu0 1
    %430 = vperm.xlu0 %429, %v66
    %v431 = vpop.permute.xlu0 %430
    %433 = vset.pattern.permute.xlu0 1
    %434 = vperm.xlu0 %433, %v67
    %v435 = vpop.permute.xlu0 %434
    %v437 = vmul.f32 %v380, %v423
    %v438 = vmul.f32 %v381, %v427
    %v439 = vmul.f32 %v382, %v431
    %v440 = vmul.f32 %v383, %v435
    %v441 = vadd.f32 %v437, %v438
    %v442 = vadd.f32 %v441, %v439
    %v443 = vadd.f32 %v442, %v440
    %v444 = vrot.slane %v443, 4
    %v445 = vadd.f32 %v443, %v444
    %v446 = vrot.slane %v445, 2
    %v447 = vadd.f32 %v445, %v446
    %v448 = vrot.slane %v447, 1
    %v449 = vadd.f32 %v447, %v448
    %s450 = sld [smem:[#allocation2 + $0x1]]
    %v451 = vstv %s450
    %v452 = vadd.f32 %v449, %v451
    %453 = vst [vmem:[%s7 + $0x1] sm:$0x1] %v452
    %454 = vset.pattern.permute.xlu0 2
    %455 = vperm.xlu0 %454, %v64
    %v456 = vpop.permute.xlu0 %455
    %458 = vset.pattern.permute.xlu0 2
    %459 = vperm.xlu0 %458, %v65
    %v460 = vpop.permute.xlu0 %459
    %462 = vset.pattern.permute.xlu0 2
    %463 = vperm.xlu0 %462, %v66
    %v464 = vpop.permute.xlu0 %463
    %466 = vset.pattern.permute.xlu0 2
    %467 = vperm.xlu0 %466, %v67
    %v468 = vpop.permute.xlu0 %467
    %v470 = vmul.f32 %v380, %v456
    %v471 = vmul.f32 %v381, %v460
    %v472 = vmul.f32 %v382, %v464
    %v473 = vmul.f32 %v383, %v468
    %v474 = vadd.f32 %v470, %v471
    %v475 = vadd.f32 %v474, %v472
    %v476 = vadd.f32 %v475, %v473
    %v477 = vrot.slane %v476, 4
    %v478 = vadd.f32 %v476, %v477
    %v479 = vrot.slane %v478, 2
    %v480 = vadd.f32 %v478, %v479
    %v481 = vrot.slane %v480, 1
    %v482 = vadd.f32 %v480, %v481
    %s483 = sld [smem:[#allocation2 + $0x2]]
    %v484 = vstv %s483
    %v485 = vadd.f32 %v482, %v484
    %486 = vst [vmem:[%s7 + $0x2] sm:$0x1] %v485
    %487 = vset.pattern.permute.xlu0 3
    %488 = vperm.xlu0 %487, %v64
    %v489 = vpop.permute.xlu0 %488
    %491 = vset.pattern.permute.xlu0 3
    %492 = vperm.xlu0 %491, %v65
    %v493 = vpop.permute.xlu0 %492
    %495 = vset.pattern.permute.xlu0 3
    %496 = vperm.xlu0 %495, %v66
    %v497 = vpop.permute.xlu0 %496
    %499 = vset.pattern.permute.xlu0 3
    %500 = vperm.xlu0 %499, %v67
    %v501 = vpop.permute.xlu0 %500
    %v503 = vmul.f32 %v380, %v489
    %v504 = vmul.f32 %v381, %v493
    %v505 = vmul.f32 %v382, %v497
    %v506 = vmul.f32 %v383, %v501
    %v507 = vadd.f32 %v503, %v504
    %v508 = vadd.f32 %v507, %v505
    %v509 = vadd.f32 %v508, %v506
    %v510 = vrot.slane %v509, 4
    %v511 = vadd.f32 %v509, %v510
    %v512 = vrot.slane %v511, 2
    %v513 = vadd.f32 %v511, %v512
    %v514 = vrot.slane %v513, 1
    %v515 = vadd.f32 %v513, %v514
    %s516 = sld [smem:[#allocation2 + $0x3]]
    %v517 = vstv %s516
    %v518 = vadd.f32 %v515, %v517
    %519 = vst [vmem:[%s7 + $0x3] sm:$0x1] %v518
    // Predicated region
    $region34: #{fc_wave_xy_forward.1} parent=1 // pred_check
      _
    $region35: #{fc_wave_xy_forward.1} parent=1 // pred_check_branch
      %521 = sbr.rel (0) target = $region37
    $region36: #{fc_wave_xy_forward.1} parent=1 // pred_region
      _
    $region37: #{fc_wave_xy_forward.1} parent=1 // pred_fallthru
      _
    // Predicated region
    $region38: #{fc_wave_xy_forward.1} parent=1 // pred_check
      _
    $region39: #{fc_wave_xy_forward.1} parent=1 // pred_check_branch
      %523 = sbr.rel (0) target = $region41
    $region40: #{fc_wave_xy_forward.1} parent=1 // pred_region
      _
    $region41: #{fc_wave_xy_forward.1} parent=1 // pred_fallthru
      _
    %524 = vsyncpa [#allocation3], 1

</llo_original>
